<compile_context>
chip_gen: v5e
topology: v5e:2x2
jax: 0.10.0
libtpu: 0.0.40
codegen_flags: <defaults>
</compile_context>

<pallas_src>
import jax
import jax.numpy as jnp
from jax.experimental import pallas as pl
from jax.experimental.pallas import tpu as pltpu

_LANE = 128


def _round_up(x: int, m: int) -> int:
    return (x + m - 1) // m * m


def _sublane_multiple(dtype) -> int:
    # vreg sublane packing: 8 for 32-bit, 16 for bf16, 32 for int8/fp8.
    return {4: 8, 2: 16, 1: 32}.get(jnp.dtype(dtype).itemsize, 8)


def _best_tile(total: int, cap: int) -> int:
    """Largest 128-multiple that divides `total` (already 128-aligned) and <= cap.
    Choosing a divisor means no extra padding beyond lane alignment."""
    cap = max(cap, _LANE)
    best = _LANE
    t = _LANE
    upper = min(total, cap)
    while t <= upper:
        if total % t == 0:
            best = t
        t += _LANE
    return best


# --------------------------------- kernels ----------------------------------

def _linear_head_kernel_single_k(x_ref, w_ref, b_ref, o_ref):
    """K fits in one tile: no accumulator scratch, bias fused into the store."""
    o_ref[...] = (
        jnp.dot(x_ref[...], w_ref[...], preferred_element_type=jnp.float32)
        + b_ref[...]
    ).astype(o_ref.dtype)
    # TODO(synk): training-mode dropout (p > 0) would use pltpu.prng_seed /
    # pltpu.prng_random_bits here; the shipped config has p = 0 (no-op).


def _linear_head_kernel_multi_k(x_ref, w_ref, b_ref, o_ref, acc_ref):
    """K is the innermost ('arbitrary') grid axis; f32 VMEM accumulator."""
    k = pl.program_id(2)

    @pl.when(k == 0)
    def _init():
        acc_ref[...] = jnp.zeros_like(acc_ref)

    acc_ref[...] += jnp.dot(
        x_ref[...], w_ref[...], preferred_element_type=jnp.float32)

    @pl.when(k == pl.num_programs(2) - 1)
    def _epilogue():
        # Bias add + downcast once per output tile, in f32.
        o_ref[...] = (acc_ref[...] + b_ref[...]).astype(o_ref.dtype)


# ----------------------------- one-time param prep ---------------------------

def prepare_linear_head_params(weight, bias, *,
                               max_batch_tile: int = 512,
                               tn_max: int = 2048,
                               tk_max: int = 4096,
                               vmem_budget_bytes: int = 40 << 20,
                               prefer_two_n_tiles: bool = True):
    """Init-time preparation (amortized over all forwards).

    weight: [D_out, D_in] (nn.Linear convention), bias: [D_out].
    - Pre-transposes W to [D_in, D_out] and zero-pads K/N to lane multiples
      exactly once, removing the per-call HBM read+write of the weight.
    - Picks large, VMEM-budgeted tiles (the head is weight-stream bound); the
      budget (default 40 MiB live) stays inside v7x's 64 MiB physical VMEM and
      is far under v5e/v6e's 128 MiB.
    """
    D_out, D_in = weight.shape
    w_it = jnp.dtype(weight.dtype).itemsize

    n_pad = _round_up(D_out, _LANE)
    k_pad = _round_up(D_in, _LANE)

    tk = _best_tile(k_pad, tk_max)
    tn_cap = tn_max
    # v7x megacore: a small-batch head has a single m-tile, so give the
    # 'parallel' j axis >= 2 steps (when N allows) so both TensorCores work.
    if prefer_two_n_tiles and n_pad >= 2 * _LANE:
        tn_cap = min(tn_cap, n_pad // 2)
    tn = _best_tile(n_pad, tn_cap)

    def _live_vmem(tn_, tk_):
        multi_k = (k_pad // tk_) > 1
        acc = max_batch_tile * tn_ * 4 if multi_k else 0
        return (2 * max_batch_tile * tk_ * w_it      # x double-buffer
                + 2 * tk_ * tn_ * w_it               # weight double-buffer
                + 2 * tn_ * w_it                     # bias double-buffer
                + 2 * max_batch_tile * tn_ * w_it    # output double-buffer
                + acc)

    # Shrink toward the budget: prefer shrinking tk, then tn (both stay
    # 128-aligned divisors of the padded dims, so no extra padding appears).
    while _live_vmem(tn, tk) > vmem_budget_bytes and tk > _LANE:
        tk = _best_tile(k_pad, max(_LANE, tk // 2))
    while _live_vmem(tn, tk) > vmem_budget_bytes and tn > _LANE:
        tn = _best_tile(n_pad, max(_LANE, tn // 2))

    # One-time pad + transpose. Zero K-padding contributes nothing to the
    # contraction; padded N columns are sliced off in the wrapper.
    w_t = jnp.pad(weight.T, ((0, k_pad - D_in), (0, n_pad - D_out)))
    b_p = jnp.pad(bias, (0, n_pad - D_out)).reshape(1, n_pad)

    return dict(w_t=w_t, b=b_p, d_in=D_in, d_out=D_out,
                k_pad=k_pad, n_pad=n_pad, tn=tn, tk=tk,
                max_batch_tile=max_batch_tile)


# --------------------------------- forward ----------------------------------

def linear_head(x, params):
    """x: [..., D_in] -> [..., D_out] = x @ weight.T + bias (nn.Linear fwd)."""
    d_in, d_out = params["d_in"], params["d_out"]
    w_t, b_p = params["w_t"], params["b"]
    k_pad, n_pad = params["k_pad"], params["n_pad"]
    tn, tk = params["tn"], params["tk"]

    lead = x.shape[:-1]
    x2 = x.reshape(-1, d_in)
    B = x2.shape[0]

    sub = _sublane_multiple(x2.dtype)          # dtype-aware sublane rounding
    tm = min(_round_up(B, sub), params["max_batch_tile"])
    m_pad = _round_up(B, tm)

    if (m_pad, k_pad) != (B, d_in):
        # Only the (small) activation is padded per call; the weight was padded
        # once at init. Padded rows/cols are sliced off below.
        x2 = jnp.pad(x2, ((0, m_pad - B), (0, k_pad - d_in)))

    grid_m, grid_n, grid_k = m_pad // tm, n_pad // tn, k_pad // tk

    x_it = jnp.dtype(x2.dtype).itemsize
    w_it = jnp.dtype(w_t.dtype).itemsize
    acc_bytes = tm * tn * 4 if grid_k > 1 else 0
    est_vmem = (2 * tm * tk * x_it + 2 * tk * tn * w_it + 2 * tn * w_it
                + 2 * tm * tn * x_it + acc_bytes)
    # Raise the scoped-VMEM default when big tiles need it; stay well under
    # v7x's 64 MiB physical VMEM.
    vmem_limit = int(min(max(32 << 20, est_vmem * 3 // 2), 56 << 20))

    cost = pl.CostEstimate(
        flops=2 * B * d_in * d_out,
        transcendentals=0,
        bytes_accessed=(x2.size * x_it
                        + grid_m * w_t.size * w_it   # W re-streamed per m-tile
                        + b_p.size * w_it
                        + m_pad * n_pad * x_it),
    )

    out_shape = jax.ShapeDtypeStruct((m_pad, n_pad), x2.dtype)

    if grid_k == 1:
        # Single K tile (common for a head): 2-D grid, no accumulator, no
        # epilogue copy — dot + bias written straight to the lane-dense output.
        out_p = pl.pallas_call(
            _linear_head_kernel_single_k,
            out_shape=out_shape,
            grid_spec=pltpu.PrefetchScalarGridSpec(
                num_scalar_prefetch=0,
                grid=(grid_m, grid_n),
                in_specs=[
                    pl.BlockSpec((tm, tk), lambda i, j: (i, 0)),   # x tile
                    pl.BlockSpec((tk, tn), lambda i, j: (0, j)),   # W^T tile
                    pl.BlockSpec((1, tn), lambda i, j: (0, j)),    # bias tile
                ],
                out_specs=pl.BlockSpec((tm, tn), lambda i, j: (i, j)),
            ),
            compiler_params=pltpu.CompilerParams(
                dimension_semantics=("parallel", "parallel"),
                vmem_limit_bytes=vmem_limit),
            cost_estimate=cost,
        )(x2, w_t, b_p)
    else:
        out_p = pl.pallas_call(
            _linear_head_kernel_multi_k,
            out_shape=out_shape,
            grid_spec=pltpu.PrefetchScalarGridSpec(
                num_scalar_prefetch=0,
                grid=(grid_m, grid_n, grid_k),
                in_specs=[
                    pl.BlockSpec((tm, tk), lambda i, j, k: (i, k)),  # x tile
                    # If xprof shows the weight DMA exposed, add
                    # pipeline_mode=pl.Buffered(3) here (costs tk*tn*itemsize).
                    pl.BlockSpec((tk, tn), lambda i, j, k: (k, j)),  # W^T tile
                    pl.BlockSpec((1, tn), lambda i, j, k: (0, j)),   # bias
                ],
                out_specs=pl.BlockSpec((tm, tn), lambda i, j, k: (i, j)),
                scratch_shapes=[pltpu.VMEM((tm, tn), jnp.float32)],
            ),
            compiler_params=pltpu.CompilerParams(
                dimension_semantics=("parallel", "parallel", "arbitrary"),
                vmem_limit_bytes=vmem_limit),
            cost_estimate=cost,
        )(x2, w_t, b_p)

    out = out_p[:B, :d_out]
    return out.reshape(*lead, d_out)


if __name__ == "__main__":
    # Shipped config: batch=8, input_dim=32, output_dim=16 (dropout p=0 -> no-op).
    B, D_in, D_out = 8, 32, 16
    key = jax.random.PRNGKey(0)
    kx, kw, kb, kx2, kw2, kb2 = jax.random.split(key, 6)

    x = jax.random.normal(kx, (B, D_in), dtype=jnp.float32)
    bound = 1.0 / (D_in ** 0.5)
    weight = jax.random.uniform(kw, (D_out, D_in), jnp.float32, -bound, bound)
    bias = jax.random.uniform(kb, (D_out,), jnp.float32, -bound, bound)

    params = prepare_linear_head_params(weight, bias)      # one-time prep
    out = jax.block_until_ready(linear_head(x, params))

    ref = x @ weight.T + bias
    assert out.shape == (B, D_out)
    assert jnp.allclose(out, ref, atol=1e-5, rtol=1e-5)

    # Sanity-check the multi-K accumulator path with small forced K tiles.
    B2, D_in2, D_out2 = 16, 256, 48
    x_2 = jax.random.normal(kx2, (B2, D_in2), dtype=jnp.float32)
    bound2 = 1.0 / (D_in2 ** 0.5)
    weight2 = jax.random.uniform(kw2, (D_out2, D_in2), jnp.float32, -bound2, bound2)
    bias2 = jax.random.uniform(kb2, (D_out2,), jnp.float32, -bound2, bound2)
    params2 = prepare_linear_head_params(weight2, bias2, tk_max=128)
    out2 = jax.block_until_ready(linear_head(x_2, params2))
    ref2 = x_2 @ weight2.T + bias2
    assert out2.shape == (B2, D_out2)
    assert jnp.allclose(out2, ref2, atol=1e-5, rtol=1e-5)

    print("KERNEL_OK")
</pallas_src>

<mosaic_0001>
module attributes {stable_mosaic.version = 11 : i64} {
  func.func @_linear_head_kernel_single_k(%arg0: i32, %arg1: i32, %arg2: memref<8x128xf32, #tpu.memory_space<vmem>>, %arg3: memref<128x128xf32, #tpu.memory_space<vmem>>, %arg4: memref<1x128xf32, #tpu.memory_space<vmem>>, %arg5: memref<8x128xf32, #tpu.memory_space<vmem>>) attributes {dimension_semantics = [#tpu.dimension_semantics<parallel>, #tpu.dimension_semantics<parallel>], iteration_bounds = array<i64: 1, 1>, scalar_prefetch = 0 : i64, scratch_operands = 0 : i64, tpu.core_type = #tpu.core_type<tc>, window_params = [{transform_indices = @transform_0, window_bounds = array<i64: 8, 128>}, {transform_indices = @transform_1, window_bounds = array<i64: 128, 128>}, {transform_indices = @transform_2, window_bounds = array<i64: 1, 128>}, {transform_indices = @transform_3, window_bounds = array<i64: 8, 128>}]} {
    %c0 = arith.constant 0 : index
    %c0_0 = arith.constant 0 : index
    %0 = vector.load %arg2[%c0, %c0_0] : memref<8x128xf32, #tpu.memory_space<vmem>>, vector<8x128xf32>
    %c0_1 = arith.constant 0 : index
    %c0_2 = arith.constant 0 : index
    %1 = vector.load %arg3[%c0_1, %c0_2] : memref<128x128xf32, #tpu.memory_space<vmem>>, vector<128x128xf32>
    %cst = arith.constant dense<0.000000e+00> : vector<8x128xf32>
    %2 = tpu.matmul %0, %1, %cst {dimension_numbers = #tpu.dot_dimension_numbers<[1], [0], [0], [1], [0, 0, 1, 1], [], []>} : vector<8x128xf32>, vector<128x128xf32>, vector<8x128xf32> -> vector<8x128xf32>
    %c0_3 = arith.constant 0 : index
    %c0_4 = arith.constant 0 : index
    %3 = vector.load %arg4[%c0_3, %c0_4] : memref<1x128xf32, #tpu.memory_space<vmem>>, vector<1x128xf32>
    %4 = vector.broadcast %3 : vector<1x128xf32> to vector<8x128xf32>
    %5 = arith.addf %2, %4 : vector<8x128xf32>
    %c0_5 = arith.constant 0 : index
    %c0_6 = arith.constant 0 : index
    %6 = vector.load %arg5[%c0_5, %c0_6] : memref<8x128xf32, #tpu.memory_space<vmem>>, vector<8x128xf32>
    tpu.vector_store %arg5[%c0_5, %c0_6], %5 {strides = array<i32>} : memref<8x128xf32, #tpu.memory_space<vmem>>, vector<8x128xf32>,
    return
  }
  func.func @transform_0(%arg0: i32, %arg1: i32) -> (i32, i32) {
    %c0_i32 = arith.constant 0 : i32
    %c0_i32_0 = arith.constant 0 : i32
    return %arg0, %c0_i32 : i32, i32
  }
  func.func @transform_1(%arg0: i32, %arg1: i32) -> (i32, i32) {
    %c0_i32 = arith.constant 0 : i32
    %c0_i32_0 = arith.constant 0 : i32
    return %c0_i32, %arg1 : i32, i32
  }
  func.func @transform_2(%arg0: i32, %arg1: i32) -> (i32, i32) {
    %c0_i32 = arith.constant 0 : i32
    %c0_i32_0 = arith.constant 0 : i32
    return %c0_i32, %arg1 : i32, i32
  }
  func.func @transform_3(%arg0: i32, %arg1: i32) -> (i32, i32) {
    %c0_i32 = arith.constant 0 : i32
    return %arg0, %arg1 : i32, i32
  }
}

</mosaic_0001>

<llo_original>
// kernel: tpu_custom_call.1
$region0: #{tpu_custom_call.1}
  #allocation0 [shape = 'u32[]', space=smem, size = 0x4, offset = 0x4, fixed_abs, tag = 'smem constant byte address 0x4 - core index']
  #allocation1 [shape = 'u32[72,128]{1,0:T(1,128)}', space=vmem, size = 0x9000, scoped, tag = 'internal scratch']
  %s0 = inlined_call_operand.hbm [shape: f32[8,128], index: 0, kind: input, shape index: {}]
  %s1 = inlined_call_operand.hbm [shape: f32[128,128], index: 1, kind: input, shape index: {}]
  %s2 = inlined_call_operand.vmem [shape: f32[1,128], index: 2, kind: input, shape index: {}]
  %s3 = inlined_call_operand.hbm [shape: f32[8,128], index: 3, kind: output, shape index: {}]
  %s4 = sld [smem:[#allocation0]]
  $region30: #{tpu_custom_call.1} parent=0
    _
  %s6 = ssub.s32 1, %s4
  %s7 = scalar_select 0, %s6, %s4
  $region1: #{tpu_custom_call.1} parent=0
    #allocation2 [shape = 'u8[4096]{0}', space=vmem, size = 0x1000, scoped, tag = 'input window, operand 0, single buffered']
    #allocation3 [shape = 's32[1]{0}', space=sflag, size = 0x4, scoped, tag = 'scoped memory for tpu_custom_call.1']
    #allocation4 [shape = 's32[1]{0}', space=sflag, size = 0x4, scoped, tag = 'scoped memory for tpu_custom_call.1']
    #allocation5 [shape = 'u8[65536]{0}', space=vmem, size = 0x10000, scoped, tag = 'input window, operand 1, single buffered']
    #allocation6 [shape = 's32[1]{0}', space=sflag, size = 0x4, scoped, tag = 'scoped memory for tpu_custom_call.1']
    #allocation7 [shape = 'u8[4096]{0}', space=vmem, size = 0x1000, scoped, tag = 'output window, operand 0, single buffered']
    %8 = vsyncpa [#allocation3], 0
    %9 = vsyncpa [#allocation6], 0
    %10 = vsyncpa [#allocation4], 0
    // Predicated region
    $region2: #{tpu_custom_call.1} parent=1 // pred_check
      _
    $region3: #{tpu_custom_call.1} parent=1 // pred_check_branch
      %12 = sbr.rel (0) target = $region5
    $region4: #{tpu_custom_call.1} parent=1 // pred_region
      %14 = vsyncadd [#allocation3], 0
      %s16 = sshll.u32 %s0, 4
      %s17 = int_to_ptr.hbm [resolvable:$true] %s16
      %s18 = sshll.u32 [#allocation2], 4
      %s19 = int_to_ptr.vmem [resolvable:$true] %s18
      %21 = dma.hbm_to_vmem [thread:$0]  %s17, 128, %s19, [#allocation3]
    $region5: #{tpu_custom_call.1} parent=1 // pred_fallthru
      _
    // Predicated region
    $region6: #{tpu_custom_call.1} parent=1 // pred_check
      _
    $region7: #{tpu_custom_call.1} parent=1 // pred_check_branch
      %23 = sbr.rel (0) target = $region9
    $region8: #{tpu_custom_call.1} parent=1 // pred_region
      %25 = vsyncadd [#allocation6], 0
      %s26 = sshll.u32 %s1, 4
      %s27 = int_to_ptr.hbm [resolvable:$true] %s26
      %s28 = sshll.u32 [#allocation5], 4
      %s29 = int_to_ptr.vmem [resolvable:$true] %s28
      %34 = dma.hbm_to_vmem [thread:$0]  %s27, 2048, %s29, [#allocation6], 128, 128, 8
    $region9: #{tpu_custom_call.1} parent=1 // pred_fallthru
      _
    // Predicated region
    $region10: #{tpu_custom_call.1} parent=1 // pred_check
      _
    $region11: #{tpu_custom_call.1} parent=1 // pred_check_branch
      %36 = sbr.rel (0) target = $region13
    $region12: #{tpu_custom_call.1} parent=1 // pred_region
      _
    $region13: #{tpu_custom_call.1} parent=1 // pred_fallthru
      _
    // Predicated region
    $region14: #{tpu_custom_call.1} parent=1 // pred_check
      _
    $region15: #{tpu_custom_call.1} parent=1 // pred_check_branch
      %38 = sbr.rel (0) target = $region17
    $region16: #{tpu_custom_call.1} parent=1 // pred_region
      %40 = dma.done [#allocation3], 128
    $region17: #{tpu_custom_call.1} parent=1 // pred_fallthru
      _
    // Predicated region
    $region18: #{tpu_custom_call.1} parent=1 // pred_check
      _
    $region19: #{tpu_custom_call.1} parent=1 // pred_check_branch
      %42 = sbr.rel (0) target = $region21
    $region20: #{tpu_custom_call.1} parent=1 // pred_region
      %44 = dma.done [#allocation6], 2048
    $region21: #{tpu_custom_call.1} parent=1 // pred_fallthru
      _
    %v45 = vld [vmem:[#allocation2] sm:$0xff]
    %v46 = vld [vmem:[#allocation5] sm:$0xff]
    %v47 = vld [vmem:[#allocation5 + $0x8] sm:$0xff]
    %v48 = vld [vmem:[#allocation5 + $0x10] sm:$0xff]
    %v49 = vld [vmem:[#allocation5 + $0x18] sm:$0xff]
    %v50 = vld [vmem:[#allocation5 + $0x20] sm:$0xff]
    %v51 = vld [vmem:[#allocation5 + $0x28] sm:$0xff]
    %v52 = vld [vmem:[#allocation5 + $0x30] sm:$0xff]
    %v53 = vld [vmem:[#allocation5 + $0x38] sm:$0xff]
    %v54 = vld [vmem:[#allocation5 + $0x40] sm:$0xff]
    %v55 = vld [vmem:[#allocation5 + $0x48] sm:$0xff]
    %v56 = vld [vmem:[#allocation5 + $0x50] sm:$0xff]
    %v57 = vld [vmem:[#allocation5 + $0x58] sm:$0xff]
    %v58 = vld [vmem:[#allocation5 + $0x60] sm:$0xff]
    %v59 = vld [vmem:[#allocation5 + $0x68] sm:$0xff]
    %v60 = vld [vmem:[#allocation5 + $0x70] sm:$0xff]
    %v61 = vld [vmem:[#allocation5 + $0x78] sm:$0xff]
    %v62 = vld [vmem:[%s2] sm:$0x1]
    %v64 = vperm.slane %v62, 0
    %66 = vmatpush.msra.mxu0 %v61
    %67 = vmatpush.msra.mxu0 %v60
    %68 = vmatpush.msra.mxu0 %v59
    %69 = vmatpush.msra.mxu0 %v58
    %70 = vmatpush.msra.mxu0 %v57
    %71 = vmatpush.msra.mxu0 %v56
    %72 = vmatpush.msra.mxu0 %v55
    %73 = vmatpush.msra.mxu0 %v54
    %74 = vmatpush.msra.mxu0 %v53
    %75 = vmatpush.msra.mxu0 %v52
    %76 = vmatpush.msra.mxu0 %v51
    %77 = vmatpush.msra.mxu0 %v50
    %78 = vmatpush.msra.mxu0 %v49
    %79 = vmatpush.msra.mxu0 %v48
    %80 = vmatpush.msra.mxu0 %v47
    %81 = vmatpush.msra.mxu0 %v46
    %82 = vmatmul.f32.gmra.mxu0 %v45
    %v83 = vpop.f32.mrf.mxu0
    %v84 = vadd.f32 %v64, %v83
    %85 = vdwg.mxu0
    %86 = vst [vmem:[#allocation7] sm:$0xff] %v84
    // Predicated region
    $region22: #{tpu_custom_call.1} parent=1 // pred_check
      _
    $region23: #{tpu_custom_call.1} parent=1 // pred_check_branch
      %88 = sbr.rel (0) target = $region25
    $region24: #{tpu_custom_call.1} parent=1 // pred_region
      %90 = vsyncadd [#allocation4], 0
      %s92 = sshll.u32 [#allocation7], 4
      %s93 = int_to_ptr.vmem [resolvable:$true] %s92
      %s94 = sshll.u32 %s3, 4
      %s95 = int_to_ptr.hbm [resolvable:$true] %s94
      %97 = dma.vmem_to_hbm [thread:$0]  %s93, 128, %s95, [#allocation4]
    $region25: #{tpu_custom_call.1} parent=1 // pred_fallthru
      _
    // Predicated region
    $region26: #{tpu_custom_call.1} parent=1 // pred_check
      _
    $region27: #{tpu_custom_call.1} parent=1 // pred_check_branch
      %99 = sbr.rel (0) target = $region29
    $region28: #{tpu_custom_call.1} parent=1 // pred_region
      %101 = dma.done [#allocation4], 128
    $region29: #{tpu_custom_call.1} parent=1 // pred_fallthru
      _
    %102 = vsyncpa [#allocation3], 1
    %103 = vsyncpa [#allocation6], 1
    %104 = vsyncpa [#allocation4], 1

</llo_original>
